<compile_context>
chip_gen: v7x
topology: tpu7x:2x2x1
jax: 0.10.0
libtpu: 0.0.40
codegen_flags: <defaults>
</compile_context>

<pallas_src>
import functools

import jax
import jax.numpy as jnp
from jax import lax
from jax.experimental import pallas as pl
from jax.experimental.pallas import tpu as pltpu


def qvalue_kernel(x_ref, w1_ref, b1_ref, w2_ref, b2_ref, w3_ref, b3_ref, o_ref):
    # x_ref : (Tb, D) f32      w1_ref: (H, D) bf16    b1_ref: (1, H) f32
    # w2_ref: (H, H)  bf16     b2_ref: (1, H) f32
    # w3_ref: (1, H)  bf16     b3_ref: (1, 1) f32 (SMEM scalar)
    # o_ref : (1, Tb) f32  (lane-dense output slab)
    x = x_ref[...].astype(jnp.bfloat16)                                 # (Tb, D)

    # Layer 1: contract D (x axis 1 with w1 axis 1) -> (Tb, H), f32 accumulate.
    h1 = lax.dot_general(x, w1_ref[...], (((1,), (1,)), ((), ())),
                         preferred_element_type=jnp.float32)
    h1 = jnp.maximum(h1 + b1_ref[...], 0.0)

    # Layer 2: contract H (h1 axis 1 with w2 axis 1) -> (Tb, H).
    h2 = lax.dot_general(h1.astype(jnp.bfloat16), w2_ref[...],
                         (((1,), (1,)), ((), ())),
                         preferred_element_type=jnp.float32)
    h2 = jnp.maximum(h2 + b2_ref[...], 0.0)

    # Layer 3: w3 (1,H) contract H with h2 (Tb,H) -> (1, Tb); lane-dense output.
    logits = lax.dot_general(w3_ref[...], h2.astype(jnp.bfloat16),
                             (((1,), (1,)), ((), ())),
                             preferred_element_type=jnp.float32)
    logits = logits + b3_ref[0, 0]
    o_ref[...] = jax.nn.sigmoid(logits).astype(o_ref.dtype)


@functools.partial(jax.jit, static_argnames=("tile_b",))
def _qvalue_forward(x, params, *, tile_b):
    """x: (B, input_dim) f32; params in torch-Linear layout, weights bf16."""
    w1, b1, w2, b2, w3, b3 = (params[k] for k in ("w1", "b1", "w2", "b2", "w3", "b3"))
    B, D = x.shape
    H = w1.shape[0]

    n_tiles = pl.cdiv(B, tile_b)
    Bp = n_tiles * tile_b
    if Bp != B:
        x = jnp.pad(x, ((0, Bp - B), (0, 0)))

    cost = pl.CostEstimate(
        flops=2 * B * (D * H + H * H + H),
        transcendentals=B,  # sigmoid
        bytes_accessed=(Bp * D * 4
                        + (w1.size + w2.size + w3.size) * 2
                        + (b1.size + b2.size + b3.size) * 4
                        + Bp * 4),
    )

    out = pl.pallas_call(
        qvalue_kernel,
        out_shape=jax.ShapeDtypeStruct((1, Bp), jnp.float32),
        grid_spec=pltpu.PrefetchScalarGridSpec(
            num_scalar_prefetch=0,
            grid=(n_tiles,),
            in_specs=[
                pl.BlockSpec((tile_b, D), lambda i: (i, 0)),        # x tile (batch-major)
                pl.BlockSpec((H, D), lambda i: (0, 0)),             # w1 (resident)
                pl.BlockSpec((1, H), lambda i: (0, 0)),             # b1 row
                pl.BlockSpec((H, H), lambda i: (0, 0)),             # w2 (resident)
                pl.BlockSpec((1, H), lambda i: (0, 0)),             # b2 row
                pl.BlockSpec((1, H), lambda i: (0, 0)),             # w3 row
                pl.BlockSpec(memory_space=pltpu.MemorySpace.SMEM),  # b3 scalar
            ],
            out_specs=pl.BlockSpec((1, tile_b), lambda i: (0, i)),  # lane-dense
        ),
        compiler_params=pltpu.CompilerParams(
            dimension_semantics=("parallel",),
        ),
        cost_estimate=cost,
    )(x, w1, b1, w2, b2, w3, b3)

    # Strip batch padding, return (B, 1) like the PyTorch module.
    return out[0, :B].reshape(B, 1)


def _round_up(n, m):
    return ((n + m - 1) // m) * m


def _select_tile_b(batch, cap=1024):
    """Pick a lane-aligned batch tile.

    Tiny batches pad only to 128 (one tile). Larger batches get >= 2 tiles so
    the 'parallel' grid axis shards across both TensorCores on v7x (the extra
    ~0.35us grid step is negligible on single-TC v5e/v6e), capped at 1024 to
    amortize per-step overhead while keeping x-tile DMA modest.
    """
    lane = 128
    bp = _round_up(max(int(batch), 1), lane)
    if bp <= lane:
        return lane
    return min(cap, _round_up(pl.cdiv(bp, 2), lane))


def qvalue_estimator(x, params, tile_b=None):
    if tile_b is None:
        tile_b = _select_tile_b(x.shape[0])
    assert tile_b % 128 == 0, "tile_b must be a multiple of 128 (lane width)"
    return _qvalue_forward(x, params, tile_b=tile_b)


def init_params(key, input_dim, hidden_dim=128):
    """Deterministic synthetic init (PyTorch-Linear-like uniform fan-in bounds).

    Weights are stored ONCE in bf16, torch Linear layout (out_features, in_features),
    so no per-call casts are emitted. Biases stay f32 as (1, out) rows; b3 is (1, 1).
    """
    ks = jax.random.split(key, 6)

    def uniform(k, shape, fan_in, dtype):
        bound = 1.0 / float(np_sqrt(fan_in))
        return jax.random.uniform(k, shape, jnp.float32,
                                  minval=-bound, maxval=bound).astype(dtype)

    return {
        "w1": uniform(ks[0], (hidden_dim, input_dim), input_dim, jnp.bfloat16),
        "b1": uniform(ks[1], (1, hidden_dim), input_dim, jnp.float32),
        "w2": uniform(ks[2], (hidden_dim, hidden_dim), hidden_dim, jnp.bfloat16),
        "b2": uniform(ks[3], (1, hidden_dim), hidden_dim, jnp.float32),
        "w3": uniform(ks[4], (1, hidden_dim), hidden_dim, jnp.bfloat16),
        "b3": uniform(ks[5], (1, 1), hidden_dim, jnp.float32),
    }


def np_sqrt(v):
    return v ** 0.5


def reference_forward(x, params):
    """Pure-JAX f32 reference of the same math (batch-major, torch layout)."""
    w1 = params["w1"].astype(jnp.float32)
    w2 = params["w2"].astype(jnp.float32)
    w3 = params["w3"].astype(jnp.float32)
    h1 = jnp.maximum(x @ w1.T + params["b1"], 0.0)
    h2 = jnp.maximum(h1 @ w2.T + params["b2"], 0.0)
    return jax.nn.sigmoid(h2 @ w3.T + params["b3"])


if __name__ == "__main__":
    key = jax.random.PRNGKey(0)
    k_x, k_p = jax.random.split(key)

    batch = 8
    input_dim = 32
    hidden_dim = 128

    x = jax.random.normal(k_x, (batch, input_dim), dtype=jnp.float32)
    params = init_params(k_p, input_dim, hidden_dim)

    out = qvalue_estimator(x, params)
    out = jax.block_until_ready(out)

    # Correctness check against a pure-JAX f32 reference. Tolerance loosened
    # because MXU operands are bf16 (accumulation stays f32).
    ref = reference_forward(x, params)
    assert out.shape == (batch, 1)
    assert jnp.allclose(out, ref, atol=2e-2, rtol=2e-2), (out, ref)

    print("KERNEL_OK")
</pallas_src>

<mosaic_0001>
module attributes {stable_mosaic.version = 11 : i64} {
  func.func @qvalue_kernel(%arg0: i32, %arg1: memref<128x32xf32, #tpu.memory_space<vmem>>, %arg2: memref<128x32xbf16, #tpu.memory_space<vmem>>, %arg3: memref<1x128xf32, #tpu.memory_space<vmem>>, %arg4: memref<128x128xbf16, #tpu.memory_space<vmem>>, %arg5: memref<1x128xf32, #tpu.memory_space<vmem>>, %arg6: memref<1x128xbf16, #tpu.memory_space<vmem>>, %arg7: memref<1x1xf32, #tpu.memory_space<smem>>, %arg8: memref<1x128xf32, #tpu.memory_space<vmem>>) attributes {dimension_semantics = [#tpu.dimension_semantics<parallel>], iteration_bounds = array<i64: 1>, scalar_prefetch = 0 : i64, scratch_operands = 0 : i64, tpu.core_type = #tpu.core_type<tc>, window_params = [{transform_indices = @transform_0, window_bounds = array<i64: 128, 32>}, {pipeline_mode = #tpu.pipeline_mode<synchronous>, transform_indices = @transform_1, window_bounds = array<i64: 128, 32>}, {pipeline_mode = #tpu.pipeline_mode<synchronous>, transform_indices = @transform_2, window_bounds = array<i64: 1, 128>}, {pipeline_mode = #tpu.pipeline_mode<synchronous>, transform_indices = @transform_3, window_bounds = array<i64: 128, 128>}, {pipeline_mode = #tpu.pipeline_mode<synchronous>, transform_indices = @transform_4, window_bounds = array<i64: 1, 128>}, {pipeline_mode = #tpu.pipeline_mode<synchronous>, transform_indices = @transform_5, window_bounds = array<i64: 1, 128>}, {transform_indices = @transform_6, window_bounds = array<i64: 1, 1>}, {transform_indices = @transform_7, window_bounds = array<i64: 1, 128>}]} {
    %c0 = arith.constant 0 : index
    %c0_0 = arith.constant 0 : index
    %0 = vector.load %arg1[%c0, %c0_0] : memref<128x32xf32, #tpu.memory_space<vmem>>, vector<128x32xf32>
    %1 = arith.truncf %0 : vector<128x32xf32> to vector<128x32xbf16>
    %c0_1 = arith.constant 0 : index
    %c0_2 = arith.constant 0 : index
    %2 = vector.load %arg2[%c0_1, %c0_2] : memref<128x32xbf16, #tpu.memory_space<vmem>>, vector<128x32xbf16>
    %cst = arith.constant dense<0.000000e+00> : vector<128x128xf32>
    %3 = tpu.matmul %1, %2, %cst {dimension_numbers = #tpu.dot_dimension_numbers<[1], [1], [0], [0], [0, 0, 1, 0], [], []>} : vector<128x32xbf16>, vector<128x32xbf16>, vector<128x128xf32> -> vector<128x128xf32>
    %c0_3 = arith.constant 0 : index
    %c0_4 = arith.constant 0 : index
    %4 = vector.load %arg3[%c0_3, %c0_4] : memref<1x128xf32, #tpu.memory_space<vmem>>, vector<1x128xf32>
    %5 = vector.broadcast %4 : vector<1x128xf32> to vector<128x128xf32>
    %6 = arith.addf %3, %5 : vector<128x128xf32>
    %cst_5 = arith.constant 0.000000e+00 : f32
    %7 = vector.broadcast %cst_5 : f32 to vector<128x128xf32>
    %8 = arith.maximumf %6, %7 : vector<128x128xf32>
    %9 = arith.truncf %8 : vector<128x128xf32> to vector<128x128xbf16>
    %c0_6 = arith.constant 0 : index
    %c0_7 = arith.constant 0 : index
    %10 = vector.load %arg4[%c0_6, %c0_7] : memref<128x128xbf16, #tpu.memory_space<vmem>>, vector<128x128xbf16>
    %cst_8 = arith.constant dense<0.000000e+00> : vector<128x128xf32>
    %11 = tpu.matmul %9, %10, %cst_8 {dimension_numbers = #tpu.dot_dimension_numbers<[1], [1], [0], [0], [0, 0, 1, 0], [], []>} : vector<128x128xbf16>, vector<128x128xbf16>, vector<128x128xf32> -> vector<128x128xf32>
    %c0_9 = arith.constant 0 : index
    %c0_10 = arith.constant 0 : index
    %12 = vector.load %arg5[%c0_9, %c0_10] : memref<1x128xf32, #tpu.memory_space<vmem>>, vector<1x128xf32>
    %13 = vector.broadcast %12 : vector<1x128xf32> to vector<128x128xf32>
    %14 = arith.addf %11, %13 : vector<128x128xf32>
    %cst_11 = arith.constant 0.000000e+00 : f32
    %15 = vector.broadcast %cst_11 : f32 to vector<128x128xf32>
    %16 = arith.maximumf %14, %15 : vector<128x128xf32>
    %c0_12 = arith.constant 0 : index
    %c0_13 = arith.constant 0 : index
    %17 = vector.load %arg6[%c0_12, %c0_13] : memref<1x128xbf16, #tpu.memory_space<vmem>>, vector<1x128xbf16>
    %18 = arith.truncf %16 : vector<128x128xf32> to vector<128x128xbf16>
    %cst_14 = arith.constant dense<0.000000e+00> : vector<1x128xf32>
    %19 = tpu.matmul %17, %18, %cst_14 {dimension_numbers = #tpu.dot_dimension_numbers<[1], [1], [0], [0], [0, 0, 1, 0], [], []>} : vector<1x128xbf16>, vector<128x128xbf16>, vector<1x128xf32> -> vector<1x128xf32>
    %c0_15 = arith.constant 0 : index
    %c0_16 = arith.constant 0 : index
    %20 = memref.load %arg7[%c0_15, %c0_16] : memref<1x1xf32, #tpu.memory_space<smem>>
    %21 = vector.broadcast %20 : f32 to vector<1x128xf32>
    %22 = arith.addf %19, %21 : vector<1x128xf32>
    %23 = arith.negf %22 : vector<1x128xf32>
    %24 = math.exp %23 : vector<1x128xf32>
    %cst_17 = arith.constant 1.000000e+00 : f32
    %25 = vector.broadcast %cst_17 : f32 to vector<1x128xf32>
    %26 = arith.addf %25, %24 : vector<1x128xf32>
    %27 = arith.divf %25, %26 : vector<1x128xf32>
    %c0_18 = arith.constant 0 : index
    %c0_19 = arith.constant 0 : index
    %28 = vector.load %arg8[%c0_18, %c0_19] : memref<1x128xf32, #tpu.memory_space<vmem>>, vector<1x128xf32>
    tpu.vector_store %arg8[%c0_18, %c0_19], %27 {strides = array<i32>} : memref<1x128xf32, #tpu.memory_space<vmem>>, vector<1x128xf32>,
    return
  }
  func.func @transform_0(%arg0: i32) -> (i32, i32) {
    %c0_i32 = arith.constant 0 : i32
    %c0_i32_0 = arith.constant 0 : i32
    return %arg0, %c0_i32 : i32, i32
  }
  func.func @transform_1(%arg0: i32) -> (i32, i32) {
    %c0_i32 = arith.constant 0 : i32
    %c0_i32_0 = arith.constant 0 : i32
    %c0_i32_1 = arith.constant 0 : i32
    return %c0_i32, %c0_i32_0 : i32, i32
  }
  func.func @transform_2(%arg0: i32) -> (i32, i32) {
    %c0_i32 = arith.constant 0 : i32
    %c0_i32_0 = arith.constant 0 : i32
    %c0_i32_1 = arith.constant 0 : i32
    return %c0_i32, %c0_i32_0 : i32, i32
  }
  func.func @transform_3(%arg0: i32) -> (i32, i32) {
    %c0_i32 = arith.constant 0 : i32
    %c0_i32_0 = arith.constant 0 : i32
    %c0_i32_1 = arith.constant 0 : i32
    return %c0_i32, %c0_i32_0 : i32, i32
  }
  func.func @transform_4(%arg0: i32) -> (i32, i32) {
    %c0_i32 = arith.constant 0 : i32
    %c0_i32_0 = arith.constant 0 : i32
    %c0_i32_1 = arith.constant 0 : i32
    return %c0_i32, %c0_i32_0 : i32, i32
  }
  func.func @transform_5(%arg0: i32) -> (i32, i32) {
    %c0_i32 = arith.constant 0 : i32
    %c0_i32_0 = arith.constant 0 : i32
    %c0_i32_1 = arith.constant 0 : i32
    return %c0_i32, %c0_i32_0 : i32, i32
  }
  func.func @transform_6(%arg0: i32) -> (i32, i32) {
    %c0_i32 = arith.constant 0 : i32
    %c0_i32_0 = arith.constant 0 : i32
    %c0_i32_1 = arith.constant 0 : i32
    return %c0_i32, %c0_i32_0 : i32, i32
  }
  func.func @transform_7(%arg0: i32) -> (i32, i32) {
    %c0_i32 = arith.constant 0 : i32
    %c0_i32_0 = arith.constant 0 : i32
    return %c0_i32, %arg0 : i32, i32
  }
}

</mosaic_0001>

<llo_original>
// kernel: _qvalue_forward.1
$region0: #{_qvalue_forward.1}
  #allocation0 [shape = 'u32[]', space=smem, size = 0x4, offset = 0x4, fixed_abs, tag = 'smem constant byte address 0x4 - core index']
  #allocation1 [shape = 'u32[144,128]{1,0:T(1,128)}', space=vmem, size = 0x12000, scoped, tag = 'internal scratch']
  #allocation2 [shape = 'f32[1,1]{1,0:T(1,128)S(6)}', space=smem, size = 0x200, scoped, tag = 'scoped memory for _qvalue_forward.1']
  %s0 = inlined_call_operand.vmem [shape: f32[128,32], index: 0, kind: input, shape index: {}]
  %s1 = inlined_call_operand.vmem [shape: bf16[128,32], index: 1, kind: input, shape index: {}]
  %s2 = inlined_call_operand.vmem [shape: f32[1,128], index: 2, kind: input, shape index: {}]
  %s3 = inlined_call_operand.vmem [shape: bf16[128,128], index: 3, kind: input, shape index: {}]
  %s4 = inlined_call_operand.vmem [shape: f32[1,128], index: 4, kind: input, shape index: {}]
  %s5 = inlined_call_operand.vmem [shape: bf16[1,128], index: 5, kind: input, shape index: {}]
  %s6 = inlined_call_operand.<no memory space> [shape: f32[1,1], index: 6, kind: input, shape index: {}]
  %s7 = inlined_call_operand.vmem [shape: f32[1,128], index: 7, kind: output, shape index: {}]
  %s8 = sld [smem:[#allocation0]]
  $region38: #{_qvalue_forward.1} parent=0
    _
  %s10 = ssub.s32 1, %s8
  %s11 = scalar_select 0, %s10, %s8
  %12 = sst [smem:[#allocation2]] %s6
  // Predicated region
  $region2: #{_qvalue_forward.1} parent=0 // pred_check
    _
  $region3: #{_qvalue_forward.1} parent=0 // pred_check_branch
    %14 = sbr.rel (0) target = $region5
  $region4: #{_qvalue_forward.1} parent=0 // pred_region
    _
  $region5: #{_qvalue_forward.1} parent=0 // pred_fallthru
    _
  // Predicated region
  $region6: #{_qvalue_forward.1} parent=0 // pred_check
    _
  $region7: #{_qvalue_forward.1} parent=0 // pred_check_branch
    %16 = sbr.rel (0) target = $region9
  $region8: #{_qvalue_forward.1} parent=0 // pred_region
    _
  $region9: #{_qvalue_forward.1} parent=0 // pred_fallthru
    _
  // Predicated region
  $region10: #{_qvalue_forward.1} parent=0 // pred_check
    _
  $region11: #{_qvalue_forward.1} parent=0 // pred_check_branch
    %18 = sbr.rel (0) target = $region13
  $region12: #{_qvalue_forward.1} parent=0 // pred_region
    _
  $region13: #{_qvalue_forward.1} parent=0 // pred_fallthru
    _
  // Predicated region
  $region14: #{_qvalue_forward.1} parent=0 // pred_check
    _
  $region15: #{_qvalue_forward.1} parent=0 // pred_check_branch
    %20 = sbr.rel (0) target = $region17
  $region16: #{_qvalue_forward.1} parent=0 // pred_region
    _
  $region17: #{_qvalue_forward.1} parent=0 // pred_fallthru
    _
  // Predicated region
  $region18: #{_qvalue_forward.1} parent=0 // pred_check
    _
  $region19: #{_qvalue_forward.1} parent=0 // pred_check_branch
    %22 = sbr.rel (0) target = $region21
  $region20: #{_qvalue_forward.1} parent=0 // pred_region
    _
  $region21: #{_qvalue_forward.1} parent=0 // pred_fallthru
    _
  // Predicated region
  $region22: #{_qvalue_forward.1} parent=0 // pred_check
    _
  $region23: #{_qvalue_forward.1} parent=0 // pred_check_branch
    %24 = sbr.rel (0) target = $region25
  $region24: #{_qvalue_forward.1} parent=0 // pred_region
    _
  $region25: #{_qvalue_forward.1} parent=0 // pred_fallthru
    _
  // Predicated region
  $region26: #{_qvalue_forward.1} parent=0 // pred_check
    _
  $region27: #{_qvalue_forward.1} parent=0 // pred_check_branch
    %26 = sbr.rel (0) target = $region29
  $region28: #{_qvalue_forward.1} parent=0 // pred_region
    _
  $region29: #{_qvalue_forward.1} parent=0 // pred_fallthru
    _
  %v28 = vld [vmem:[%s0] sm:$0xff]
  %v29 = vld [vmem:[%s0 + $0x8] sm:$0xff]
  %v30 = vld [vmem:[%s0 + $0x10] sm:$0xff]
  %v31 = vld [vmem:[%s0 + $0x18] sm:$0xff]
  %v32 = vld [vmem:[%s0 + $0x20] sm:$0xff]
  %v33 = vld [vmem:[%s0 + $0x28] sm:$0xff]
  %v34 = vld [vmem:[%s0 + $0x30] sm:$0xff]
  %v35 = vld [vmem:[%s0 + $0x38] sm:$0xff]
  %v36 = vld [vmem:[%s0 + $0x40] sm:$0xff]
  %v37 = vld [vmem:[%s0 + $0x48] sm:$0xff]
  %v38 = vld [vmem:[%s0 + $0x50] sm:$0xff]
  %v39 = vld [vmem:[%s0 + $0x58] sm:$0xff]
  %v40 = vld [vmem:[%s0 + $0x60] sm:$0xff]
  %v41 = vld [vmem:[%s0 + $0x68] sm:$0xff]
  %v42 = vld [vmem:[%s0 + $0x70] sm:$0xff]
  %v43 = vld [vmem:[%s0 + $0x78] sm:$0xff]
  %v44 = vpack.c.bf16 %v29, %v28
  %v45 = vpack.c.bf16 %v31, %v30
  %v46 = vpack.c.bf16 %v33, %v32
  %v47 = vpack.c.bf16 %v35, %v34
  %v48 = vpack.c.bf16 %v37, %v36
  %v49 = vpack.c.bf16 %v39, %v38
  %v50 = vpack.c.bf16 %v41, %v40
  %v51 = vpack.c.bf16 %v43, %v42
  %v52 = vld [vmem:[%s1] sm:$0xf]
  %v53 = vld [vmem:[%s1 + $0x4] sm:$0xf]
  %v54 = vld [vmem:[%s1 + $0x8] sm:$0xf]
  %v55 = vld [vmem:[%s1 + $0xc] sm:$0xf]
  %v56 = vld [vmem:[%s1 + $0x10] sm:$0xf]
  %v57 = vld [vmem:[%s1 + $0x14] sm:$0xf]
  %v58 = vld [vmem:[%s1 + $0x18] sm:$0xf]
  %v59 = vld [vmem:[%s1 + $0x1c] sm:$0xf]
  %v60 = vld [vmem:[%s1 + $0x20] sm:$0xf]
  %v61 = vld [vmem:[%s1 + $0x24] sm:$0xf]
  %v62 = vld [vmem:[%s1 + $0x28] sm:$0xf]
  %v63 = vld [vmem:[%s1 + $0x2c] sm:$0xf]
  %v64 = vld [vmem:[%s1 + $0x30] sm:$0xf]
  %v65 = vld [vmem:[%s1 + $0x34] sm:$0xf]
  %v66 = vld [vmem:[%s1 + $0x38] sm:$0xf]
  %v67 = vld [vmem:[%s1 + $0x3c] sm:$0xf]
  %v68 = vld [vmem:[%s2] sm:$0x1]
  %v70 = vlaneseq
  %v71 = vshrl.u32 %v70, 7
  %v72 = vsub.s32 0, %v71
  %v73 = vrot.slane %v68, %v72
  %v91 = vunpack.c.l.b16 %v52
  %v92 = vunpack.c.l.b16 %v53
  %v93 = vunpack.c.l.b16 %v54
  %v94 = vunpack.c.l.b16 %v55
  %v95 = vunpack.c.l.b16 %v56
  %v96 = vunpack.c.l.b16 %v57
  %v97 = vunpack.c.l.b16 %v58
  %v98 = vunpack.c.l.b16 %v59
  %v99 = vunpack.c.l.b16 %v60
  %v100 = vunpack.c.l.b16 %v61
  %v101 = vunpack.c.l.b16 %v62
  %v102 = vunpack.c.l.b16 %v63
  %v103 = vunpack.c.l.b16 %v64
  %v104 = vunpack.c.l.b16 %v65
  %v105 = vunpack.c.l.b16 %v66
  %v106 = vunpack.c.l.b16 %v67
  %v107 = vpack.c.b16 %v92, %v91
  %v108 = vpack.c.b16 %v94, %v93
  %v109 = vpack.c.b16 %v96, %v95
  %v110 = vpack.c.b16 %v98, %v97
  %v111 = vpack.c.b16 %v100, %v99
  %v112 = vpack.c.b16 %v102, %v101
  %v113 = vpack.c.b16 %v104, %v103
  %v114 = vpack.c.b16 %v106, %v105
  %vm115 = vcmask 261120
  %v117 = vsel %vm115, %v44, 0
  %v120 = vsel %vm115, %v45, 0
  %v123 = vsel %vm115, %v46, 0
  %v126 = vsel %vm115, %v47, 0
  %v129 = vsel %vm115, %v48, 0
  %v132 = vsel %vm115, %v49, 0
  %v135 = vsel %vm115, %v50, 0
  %v138 = vsel %vm115, %v51, 0
  %v141 = vsel %vm115, %v107, 0
  %v144 = vsel %vm115, %v108, 0
  %v147 = vsel %vm115, %v109, 0
  %v150 = vsel %vm115, %v110, 0
  %v153 = vsel %vm115, %v111, 0
  %v156 = vsel %vm115, %v112, 0
  %v159 = vsel %vm115, %v113, 0
  %v162 = vsel %vm115, %v114, 0
  %164 = vmatprep.subr.bf16.mxu0 0
  %165 = vmatpush1.bf16.xpose.msra.mxu0 %v141
  %166 = vmatprep.subr.bf16.mxu0 0
  %167 = vmatpush1.bf16.xpose.msra.mxu0 %v144
  %168 = vmatprep.subr.bf16.mxu0 0
  %169 = vmatpush1.bf16.xpose.msra.mxu0 %v147
  %170 = vmatprep.subr.bf16.mxu0 0
  %171 = vmatpush1.bf16.xpose.msra.mxu0 %v150
  %172 = vmatprep.subr.bf16.mxu0 0
  %173 = vmatpush1.bf16.xpose.msra.mxu0 %v153
  %174 = vmatprep.subr.bf16.mxu0 0
  %175 = vmatpush1.bf16.xpose.msra.mxu0 %v156
  %176 = vmatprep.subr.bf16.mxu0 0
  %177 = vmatpush1.bf16.xpose.msra.mxu0 %v159
  %178 = vmatprep.subr.bf16.mxu0 0
  %179 = vmatpush1.bf16.xpose.msra.mxu0 %v162
  %180 = vmatprep.subr.bf16.mxu0 0
  %181 = vmatpush1.bf16.xpose.msra.mxu0 0
  %182 = vmatprep.subr.bf16.mxu0 0
  %183 = vmatpush1.bf16.xpose.msra.mxu0 0
  %184 = vmatprep.subr.bf16.mxu0 0
  %185 = vmatpush1.bf16.xpose.msra.mxu0 0
  %186 = vmatprep.subr.bf16.mxu0 0
  %187 = vmatpush1.bf16.xpose.msra.mxu0 0
  %188 = vmatprep.subr.bf16.mxu0 0
  %189 = vmatpush1.bf16.xpose.msra.mxu0 0
  %190 = vmatprep.subr.bf16.mxu0 0
  %191 = vmatpush1.bf16.xpose.msra.mxu0 0
  %192 = vmatprep.subr.bf16.mxu0 0
  %193 = vmatpush1.bf16.xpose.msra.mxu0 0
  %194 = vmatprep.subr.bf16.mxu0 0
  %195 = vmatpush1.bf16.xpose.msra.mxu0 0
  %196 = vmatprep.mubr.bf16.mxu0 0
  %197 = vmatmul.mubr.bf16.gmra.mrb[0].mxu0 %v117
  %v198 = vpop.f32.mrb[0].mxu0
  %v199 = vadd.f32 %v73, %v198
  %v200 = vpop.f32.mrb[0].mxu0
  %v201 = vpop.f32.mrb[0].mxu0
  %v202 = vadd.f32 %v73, %v201
  %v203 = vpop.f32.mrb[0].mxu0
  %204 = vmatprep.mubr.bf16.mxu0 0
  %205 = vmatmul.mubr.bf16.gmra.mrb[0].mxu0 %v120
  %v206 = vpop.f32.mrb[0].mxu0
  %v207 = vadd.f32 %v73, %v206
  %v208 = vpop.f32.mrb[0].mxu0
  %v209 = vpop.f32.mrb[0].mxu0
  %v210 = vadd.f32 %v73, %v209
  %v211 = vpop.f32.mrb[0].mxu0
  %212 = vmatprep.mubr.bf16.mxu0 0
  %213 = vmatmul.mubr.bf16.gmra.mrb[0].mxu0 %v123
  %v214 = vpop.f32.mrb[0].mxu0
  %v215 = vadd.f32 %v73, %v214
  %v216 = vpop.f32.mrb[0].mxu0
  %v217 = vpop.f32.mrb[0].mxu0
  %v218 = vadd.f32 %v73, %v217
  %v219 = vpop.f32.mrb[0].mxu0
  %220 = vmatprep.mubr.bf16.mxu0 0
  %221 = vmatmul.mubr.bf16.gmra.mrb[0].mxu0 %v126
  %v222 = vpop.f32.mrb[0].mxu0
  %v223 = vadd.f32 %v73, %v222
  %v224 = vpop.f32.mrb[0].mxu0
  %v225 = vpop.f32.mrb[0].mxu0
  %v226 = vadd.f32 %v73, %v225
  %v227 = vpop.f32.mrb[0].mxu0
  %228 = vmatprep.mubr.bf16.mxu0 0
  %229 = vmatmul.mubr.bf16.gmra.mrb[0].mxu0 %v129
  %v230 = vpop.f32.mrb[0].mxu0
  %v231 = vadd.f32 %v73, %v230
  %v232 = vpop.f32.mrb[0].mxu0
  %v233 = vpop.f32.mrb[0].mxu0
  %v234 = vadd.f32 %v73, %v233
  %v235 = vpop.f32.mrb[0].mxu0
  %236 = vmatprep.mubr.bf16.mxu0 0
  %237 = vmatmul.mubr.bf16.gmra.mrb[0].mxu0 %v132
  %v238 = vpop.f32.mrb[0].mxu0
  %v239 = vadd.f32 %v73, %v238
  %v240 = vpop.f32.mrb[0].mxu0
  %v241 = vpop.f32.mrb[0].mxu0
  %v242 = vadd.f32 %v73, %v241
  %v243 = vpop.f32.mrb[0].mxu0
  %244 = vmatprep.mubr.bf16.mxu0 0
  %245 = vmatmul.mubr.bf16.gmra.mrb[0].mxu0 %v135
  %v246 = vpop.f32.mrb[0].mxu0
  %v247 = vadd.f32 %v73, %v246
  %v248 = vpop.f32.mrb[0].mxu0
  %v249 = vpop.f32.mrb[0].mxu0
  %v250 = vadd.f32 %v73, %v249
  %v251 = vpop.f32.mrb[0].mxu0
  %252 = vmatprep.mubr.bf16.mxu0 0
  %253 = vmatmul.mubr.bf16.gmra.mrb[0].mxu0 %v138
  %v254 = vpop.f32.mrb[0].mxu0
  %v255 = vadd.f32 %v73, %v254
  %v256 = vpop.f32.mrb[0].mxu0
  %v257 = vpop.f32.mrb[0].mxu0
  %v258 = vadd.f32 %v73, %v257
  %v259 = vpop.f32.mrb[0].mxu0
  %260 = vdwg.mxu0
  %v261 = vmax.f32 %v199, 0.0
  %v262 = vmax.f32 %v202, 0.0
  %v263 = vmax.f32 %v207, 0.0
  %v264 = vmax.f32 %v210, 0.0
  %v265 = vmax.f32 %v215, 0.0
  %v266 = vmax.f32 %v218, 0.0
  %v267 = vmax.f32 %v223, 0.0
  %v268 = vmax.f32 %v226, 0.0
  %v269 = vmax.f32 %v231, 0.0
  %v270 = vmax.f32 %v234, 0.0
  %v271 = vmax.f32 %v239, 0.0
  %v272 = vmax.f32 %v242, 0.0
  %v273 = vmax.f32 %v247, 0.0
  %v274 = vmax.f32 %v250, 0.0
  %v275 = vmax.f32 %v255, 0.0
  %v276 = vmax.f32 %v258, 0.0
  %v277 = vpack.c.bf16 %v262, %v261
  %v278 = vpack.c.bf16 %v264, %v263
  %v279 = vpack.c.bf16 %v266, %v265
  %v280 = vpack.c.bf16 %v268, %v267
  %v281 = vpack.c.bf16 %v270, %v269
  %v282 = vpack.c.bf16 %v272, %v271
  %v283 = vpack.c.bf16 %v274, %v273
  %v284 = vpack.c.bf16 %v276, %v275
  %v285 = vld [vmem:[%s3] sm:$0xf]
  %v286 = vld [vmem:[%s3 + $0x4] sm:$0xf]
  %v287 = vld [vmem:[%s3 + $0x8] sm:$0xf]
  %v288 = vld [vmem:[%s3 + $0xc] sm:$0xf]
  %v289 = vld [vmem:[%s3 + $0x10] sm:$0xf]
  %v290 = vld [vmem:[%s3 + $0x14] sm:$0xf]
  %v291 = vld [vmem:[%s3 + $0x18] sm:$0xf]
  %v292 = vld [vmem:[%s3 + $0x1c] sm:$0xf]
  %v293 = vld [vmem:[%s3 + $0x20] sm:$0xf]
  %v294 = vld [vmem:[%s3 + $0x24] sm:$0xf]
  %v295 = vld [vmem:[%s3 + $0x28] sm:$0xf]
  %v296 = vld [vmem:[%s3 + $0x2c] sm:$0xf]
  %v297 = vld [vmem:[%s3 + $0x30] sm:$0xf]
  %v298 = vld [vmem:[%s3 + $0x34] sm:$0xf]
  %v299 = vld [vmem:[%s3 + $0x38] sm:$0xf]
  %v300 = vld [vmem:[%s3 + $0x3c] sm:$0xf]
  %v301 = vld [vmem:[%s4] sm:$0x1]
  %v303 = vlaneseq
  %v304 = vshrl.u32 %v303, 7
  %v305 = vsub.s32 0, %v304
  %v306 = vrot.slane %v301, %v305
  %v324 = vunpack.c.l.b16 %v285
  %v325 = vunpack.c.l.b16 %v286
  %v326 = vunpack.c.l.b16 %v287
  %v327 = vunpack.c.l.b16 %v288
  %v328 = vunpack.c.l.b16 %v289
  %v329 = vunpack.c.l.b16 %v290
  %v330 = vunpack.c.l.b16 %v291
  %v331 = vunpack.c.l.b16 %v292
  %v332 = vunpack.c.l.b16 %v293
  %v333 = vunpack.c.l.b16 %v294
  %v334 = vunpack.c.l.b16 %v295
  %v335 = vunpack.c.l.b16 %v296
  %v336 = vunpack.c.l.b16 %v297
  %v337 = vunpack.c.l.b16 %v298
  %v338 = vunpack.c.l.b16 %v299
  %v339 = vunpack.c.l.b16 %v300
  %v340 = vpack.c.b16 %v325, %v324
  %v341 = vpack.c.b16 %v327, %v326
  %v342 = vpack.c.b16 %v329, %v328
  %v343 = vpack.c.b16 %v331, %v330
  %v344 = vpack.c.b16 %v333, %v332
  %v345 = vpack.c.b16 %v335, %v334
  %v346 = vpack.c.b16 %v337, %v336
  %v347 = vpack.c.b16 %v339, %v338
  %356 = vmatprep.subr.bf16.mxu0 0
  %357 = vmatpush1.bf16.xpose.msra.mxu0 %v340
  %358 = vmatprep.subr.bf16.mxu0 0
  %359 = vmatpush1.bf16.xpose.msra.mxu0 %v341
  %360 = vmatprep.subr.bf16.mxu0 0
  %361 = vmatpush1.bf16.xpose.msra.mxu0 %v342
  %362 = vmatprep.subr.bf16.mxu0 0
  %363 = vmatpush1.bf16.xpose.msra.mxu0 %v343
  %364 = vmatprep.subr.bf16.mxu0 0
  %365 = vmatpush1.bf16.xpose.msra.mxu0 %v344
  %366 = vmatprep.subr.bf16.mxu0 0
  %367 = vmatpush1.bf16.xpose.msra.mxu0 %v345
  %368 = vmatprep.subr.bf16.mxu0 0
  %369 = vmatpush1.bf16.xpose.msra.mxu0 %v346
  %370 = vmatprep.subr.bf16.mxu0 0
  %371 = vmatpush1.bf16.xpose.msra.mxu0 %v347
  %372 = vmatprep.subr.bf16.mxu0 0
  %373 = vmatpush1.bf16.xpose.msra.mxu0 0
  %374 = vmatprep.subr.bf16.mxu0 0
  %375 = vmatpush1.bf16.xpose.msra.mxu0 0
  %376 = vmatprep.subr.bf16.mxu0 0
  %377 = vmatpush1.bf16.xpose.msra.mxu0 0
  %378 = vmatprep.subr.bf16.mxu0 0
  %379 = vmatpush1.bf16.xpose.msra.mxu0 0
  %380 = vmatprep.subr.bf16.mxu0 0
  %381 = vmatpush1.bf16.xpose.msra.mxu0 0
  %382 = vmatprep.subr.bf16.mxu0 0
  %383 = vmatpush1.bf16.xpose.msra.mxu0 0
  %384 = vmatprep.subr.bf16.mxu0 0
  %385 = vmatpush1.bf16.xpose.msra.mxu0 0
  %386 = vmatprep.subr.bf16.mxu0 0
  %387 = vmatpush1.bf16.xpose.msra.mxu0 0
  %388 = vmatprep.mubr.bf16.mxu0 0
  %389 = vmatmul.mubr.bf16.gmra.mrb[0].mxu0 %v277
  %v390 = vpop.f32.mrb[0].mxu0
  %v391 = vadd.f32 %v306, %v390
  %v392 = vpop.f32.mrb[0].mxu0
  %v393 = vpop.f32.mrb[0].mxu0
  %v394 = vadd.f32 %v306, %v393
  %v395 = vpop.f32.mrb[0].mxu0
  %396 = vmatprep.mubr.bf16.mxu0 0
  %397 = vmatmul.mubr.bf16.gmra.mrb[0].mxu0 %v278
  %v398 = vpop.f32.mrb[0].mxu0
  %v399 = vadd.f32 %v306, %v398
  %v400 = vpop.f32.mrb[0].mxu0
  %v401 = vpop.f32.mrb[0].mxu0
  %v402 = vadd.f32 %v306, %v401
  %v403 = vpop.f32.mrb[0].mxu0
  %404 = vmatprep.mubr.bf16.mxu0 0
  %405 = vmatmul.mubr.bf16.gmra.mrb[0].mxu0 %v279
  %v406 = vpop.f32.mrb[0].mxu0
  %v407 = vadd.f32 %v306, %v406
  %v408 = vpop.f32.mrb[0].mxu0
  %v409 = vpop.f32.mrb[0].mxu0
  %v410 = vadd.f32 %v306, %v409
  %v411 = vpop.f32.mrb[0].mxu0
  %412 = vmatprep.mubr.bf16.mxu0 0
  %413 = vmatmul.mubr.bf16.gmra.mrb[0].mxu0 %v280
  %v414 = vpop.f32.mrb[0].mxu0
  %v415 = vadd.f32 %v306, %v414
  %v416 = vpop.f32.mrb[0].mxu0
  %v417 = vpop.f32.mrb[0].mxu0
  %v418 = vadd.f32 %v306, %v417
  %v419 = vpop.f32.mrb[0].mxu0
  %420 = vmatprep.mubr.bf16.mxu0 0
  %421 = vmatmul.mubr.bf16.gmra.mrb[0].mxu0 %v281
  %v422 = vpop.f32.mrb[0].mxu0
  %v423 = vadd.f32 %v306, %v422
  %v424 = vpop.f32.mrb[0].mxu0
  %v425 = vpop.f32.mrb[0].mxu0
  %v426 = vadd.f32 %v306, %v425
  %v427 = vpop.f32.mrb[0].mxu0
  %428 = vmatprep.mubr.bf16.mxu0 0
  %429 = vmatmul.mubr.bf16.gmra.mrb[0].mxu0 %v282
  %v430 = vpop.f32.mrb[0].mxu0
  %v431 = vadd.f32 %v306, %v430
  %v432 = vpop.f32.mrb[0].mxu0
  %v433 = vpop.f32.mrb[0].mxu0
  %v434 = vadd.f32 %v306, %v433
  %v435 = vpop.f32.mrb[0].mxu0
  %436 = vmatprep.mubr.bf16.mxu0 0
  %437 = vmatmul.mubr.bf16.gmra.mrb[0].mxu0 %v283
  %v438 = vpop.f32.mrb[0].mxu0
  %v439 = vadd.f32 %v306, %v438
  %v440 = vpop.f32.mrb[0].mxu0
  %v441 = vpop.f32.mrb[0].mxu0
  %v442 = vadd.f32 %v306, %v441
  %v443 = vpop.f32.mrb[0].mxu0
  %444 = vmatprep.mubr.bf16.mxu0 0
  %445 = vmatmul.mubr.bf16.gmra.mrb[0].mxu0 %v284
  %v446 = vpop.f32.mrb[0].mxu0
  %v447 = vadd.f32 %v306, %v446
  %v448 = vpop.f32.mrb[0].mxu0
  %v449 = vpop.f32.mrb[0].mxu0
  %v450 = vadd.f32 %v306, %v449
  %v451 = vpop.f32.mrb[0].mxu0
  %452 = vdwg.mxu0
  %v453 = vmax.f32 %v391, 0.0
  %v454 = vmax.f32 %v394, 0.0
  %v455 = vmax.f32 %v399, 0.0
  %v456 = vmax.f32 %v402, 0.0
  %v457 = vmax.f32 %v407, 0.0
  %v458 = vmax.f32 %v410, 0.0
  %v459 = vmax.f32 %v415, 0.0
  %v460 = vmax.f32 %v418, 0.0
  %v461 = vmax.f32 %v423, 0.0
  %v462 = vmax.f32 %v426, 0.0
  %v463 = vmax.f32 %v431, 0.0
  %v464 = vmax.f32 %v434, 0.0
  %v465 = vmax.f32 %v439, 0.0
  %v466 = vmax.f32 %v442, 0.0
  %v467 = vmax.f32 %v447, 0.0
  %v468 = vmax.f32 %v450, 0.0
  %v469 = vld [vmem:[%s5] sm:$0x1]
  %v470 = vpack.c.bf16 %v454, %v453
  %v471 = vpack.c.bf16 %v456, %v455
  %v472 = vpack.c.bf16 %v458, %v457
  %v473 = vpack.c.bf16 %v460, %v459
  %v474 = vpack.c.bf16 %v462, %v461
  %v475 = vpack.c.bf16 %v464, %v463
  %v476 = vpack.c.bf16 %v466, %v465
  %v477 = vpack.c.bf16 %v468, %v467
  %s478 = sld [smem:[#allocation2]]
  %v479 = vstv %s478
  %480 = vmatprep.subr.bf16.mxu0 0
  %481 = vmatpush1.bf16.xpose.msra.mxu0 %v470
  %482 = vmatprep.subr.bf16.mxu0 0
  %483 = vmatpush1.bf16.xpose.msra.mxu0 %v471
  %484 = vmatprep.subr.bf16.mxu0 0
  %485 = vmatpush1.bf16.xpose.msra.mxu0 %v472
  %486 = vmatprep.subr.bf16.mxu0 0
  %487 = vmatpush1.bf16.xpose.msra.mxu0 %v473
  %488 = vmatprep.subr.bf16.mxu0 0
  %489 = vmatpush1.bf16.xpose.msra.mxu0 %v474
  %490 = vmatprep.subr.bf16.mxu0 0
  %491 = vmatpush1.bf16.xpose.msra.mxu0 %v475
  %492 = vmatprep.subr.bf16.mxu0 0
  %493 = vmatpush1.bf16.xpose.msra.mxu0 %v476
  %494 = vmatprep.subr.bf16.mxu0 0
  %495 = vmatpush1.bf16.xpose.msra.mxu0 %v477
  %496 = vmatprep.subr.bf16.mxu0 0
  %497 = vmatpush1.bf16.xpose.msra.mxu0 0
  %498 = vmatprep.subr.bf16.mxu0 0
  %499 = vmatpush1.bf16.xpose.msra.mxu0 0
  %500 = vmatprep.subr.bf16.mxu0 0
  %501 = vmatpush1.bf16.xpose.msra.mxu0 0
  %502 = vmatprep.subr.bf16.mxu0 0
  %503 = vmatpush1.bf16.xpose.msra.mxu0 0
  %504 = vmatprep.subr.bf16.mxu0 0
  %505 = vmatpush1.bf16.xpose.msra.mxu0 0
  %506 = vmatprep.subr.bf16.mxu0 0
  %507 = vmatpush1.bf16.xpose.msra.mxu0 0
  %508 = vmatprep.subr.bf16.mxu0 0
  %509 = vmatpush1.bf16.xpose.msra.mxu0 0
  %510 = vmatprep.subr.bf16.mxu0 0
  %511 = vmatpush1.bf16.xpose.msra.mxu0 0
  %512 = vmatprep.mubr.bf16.mxu0 0
  %513 = vmatmul.mubr.bf16.gmra.mrb[0].mxu0 %v469
  %v514 = vpop.f32.mrb[0].mxu0
  %v515 = vadd.f32 %v479, %v514
  %v516 = vpop.f32.mrb[0].mxu0
  %v517 = vpop.f32.mrb[0].mxu0
  %v518 = vpop.f32.mrb[0].mxu0
  %519 = vdwg.mxu0
  %v520 = vxor.u32 %v515, 2147483648
  %v521 = vmul.f32 %v520, 1.442695
  %v522 = vpow.pop %v521
  %v523 = vadd.f32 %v522, 1.0
  %v524 = vrcp.pop %v523
  %v525 = vmul.f32 1.0, %v524
  %526 = vst [vmem:[%s7] sm:$0x1] %v525
  // Predicated region
  $region30: #{_qvalue_forward.1} parent=0 // pred_check
    _
  $region31: #{_qvalue_forward.1} parent=0 // pred_check_branch
    %528 = sbr.rel (0) target = $region33
  $region32: #{_qvalue_forward.1} parent=0 // pred_region
    _
  $region33: #{_qvalue_forward.1} parent=0 // pred_fallthru
    _
  // Predicated region
  $region34: #{_qvalue_forward.1} parent=0 // pred_check
    _
  $region35: #{_qvalue_forward.1} parent=0 // pred_check_branch
    %530 = sbr.rel (0) target = $region37
  $region36: #{_qvalue_forward.1} parent=0 // pred_region
    _
  $region37: #{_qvalue_forward.1} parent=0 // pred_fallthru
    _

</llo_original>
